<compile_context>
chip_gen: v7x
topology: tpu7x:2x2x1
jax: 0.10.0
libtpu: 0.0.40
codegen_flags: <defaults>
</compile_context>

<pallas_src>
import math

import jax
import jax.numpy as jnp
from jax.experimental import pallas as pl
from jax.experimental.pallas import tpu as pltpu


def _round_up(x, m):
    return ((x + m - 1) // m) * m


def _num_grid_cores():
    """TensorCores a single Pallas 'parallel' grid axis can be sharded over."""
    try:
        kind = (getattr(jax.devices()[0], "device_kind", "") or "").lower()
    except Exception:
        return 1
    if "v7" in kind or "7x" in kind:
        return 2            # v7x: 2 TensorCores per chip
    if "v4" in kind or "v5p" in kind:
        return 2            # megacore generations
    return 1                # v5e / v6e: single TC, grid is a serial loop


def _make_layer_norm_kernel(eps, k, H, tm, chunk):
    """Kernel over a (tm, k*H) tile; each 128-lane row holds k logical rows."""
    W = k * H
    use_seg = k > 1
    nchunks = tm // chunk if chunk < tm else 1

    def _normalize(x, w, b, seg):
        # x: (rows, W) float32
        if use_seg:
            inv_h = jnp.float32(1.0 / H)
            # Segmented mean/var via the resident block-diagonal seg matrix on
            # the MXU: reduces AND broadcasts each statistic across its H-wide
            # segment, keeping the tile lane-dense (no reshape, no masked
            # partial stores).  Precision pinned deliberately to DEFAULT:
            # Mosaic's f32xf32 matmul path already matches the f32 reference
            # to 1e-5 (asserted in __main__); HIGHEST would only add MXU
            # passes on v5e.  MXU work is hidden under the HBM-bound DMA.
            mean = jnp.dot(x, seg, preferred_element_type=jnp.float32,
                           precision=jax.lax.Precision.DEFAULT) * inv_h
            xc = x - mean
            var = jnp.dot(xc * xc, seg, preferred_element_type=jnp.float32,
                          precision=jax.lax.Precision.DEFAULT) * inv_h
        else:
            mean = jnp.mean(x, axis=-1, keepdims=True)
            xc = x - mean
            var = jnp.mean(xc * xc, axis=-1, keepdims=True)
        inv = jax.lax.rsqrt(var + eps)
        return xc * inv * w + b

    if use_seg:
        def kernel(x_ref, w_ref, b_ref, seg_ref, o_ref):
            w = w_ref[...]
            b = b_ref[...]
            seg = seg_ref[...]
            if nchunks == 1:
                x = x_ref[...].astype(jnp.float32)
                o_ref[...] = _normalize(x, w, b, seg).astype(o_ref.dtype)
            else:
                # Chunk compute over the row axis to bound live f32 temps
                # while keeping the single big DMA block.
                def body(c, carry):
                    i = pl.multiple_of(c * chunk, chunk)
                    x = x_ref[pl.ds(i, chunk), :].astype(jnp.float32)
                    o_ref[pl.ds(i, chunk), :] = _normalize(x, w, b, seg).astype(o_ref.dtype)
                    return carry
                jax.lax.fori_loop(0, nchunks, body, 0, unroll=True)
    else:
        def kernel(x_ref, w_ref, b_ref, o_ref):
            w = w_ref[...]
            b = b_ref[...]
            if nchunks == 1:
                x = x_ref[...].astype(jnp.float32)
                o_ref[...] = _normalize(x, w, b, None).astype(o_ref.dtype)
            else:
                def body(c, carry):
                    i = pl.multiple_of(c * chunk, chunk)
                    x = x_ref[pl.ds(i, chunk), :].astype(jnp.float32)
                    o_ref[pl.ds(i, chunk), :] = _normalize(x, w, b, None).astype(o_ref.dtype)
                    return carry
                jax.lax.fori_loop(0, nchunks, body, 0, unroll=True)

    return kernel


def layer_norm(x, weight, bias=None, eps=1e-5, *, max_row_tile=4096):
    """Equivalent of F.layer_norm(x, (H,), weight, bias, eps); x: (..., H)."""
    orig_shape = x.shape
    H = int(orig_shape[-1])
    rows = int(math.prod(orig_shape[:-1])) if len(orig_shape) > 1 else 1

    # Lane packing for small H: pack k logical rows per 128-lane row so stores
    # are full-width vst instead of masked vst.msk partial stores.
    if H < 128 and 128 % H == 0:
        k = 128 // H
    else:
        k = 1
    W = k * H

    eb = jnp.dtype(x.dtype).itemsize
    # Sublane alignment for the row (second-minor) axis of non-full blocks.
    row_align = 8 if eb >= 4 else (16 if eb == 2 else 32)

    # Pad rows only up to a multiple of k (<= k-1 rows), then bit-cast pack.
    rows_pad = _round_up(rows, k)
    rp = rows_pad // k
    x2 = x.reshape(rows, H)
    if rows_pad != rows:
        x2 = jnp.concatenate(
            [x2, jnp.zeros((rows_pad - rows, H), dtype=x.dtype)], axis=0)
    xp = x2.reshape(rp, W)

    # --- tile selection --------------------------------------------------
    VMEM_TILE_BUDGET = 28 * 1024 * 1024      # safely below v7x's 64 MiB VMEM
    io_bytes_per_row = 4 * W * eb            # (in + out) x double buffer
    tmp_bytes_per_row = 6 * W * 4            # f32 intermediates (upper bound)
    tm = VMEM_TILE_BUDGET // (io_bytes_per_row + tmp_bytes_per_row)
    tm = max(row_align, min(int(tm), int(max_row_tile)))
    if tm >= 2048:
        tm = (tm // 1024) * 1024             # keep 1024-row compute chunks exact
    else:
        tm = max(row_align, (tm // row_align) * row_align)

    cores = _num_grid_cores()
    if cores > 1 and rp >= cores * row_align:
        # Only multi-TensorCore chips benefit from >= `cores` grid steps on
        # the "parallel" axis; elsewhere this would just shrink tiles.
        tm = min(tm, _round_up(pl.cdiv(rp, cores), row_align))

    if tm >= rp:
        tm = rp                              # single full-array block
    grid = pl.cdiv(rp, tm)                   # ragged last block is masked

    # In-kernel compute chunk (bounds live f32 temporaries at big tiles).
    chunk = tm
    if tm > 1024:
        for c in (1024, 512, 256):
            if c >= row_align and tm % c == 0:
                chunk = c
                break

    # --- resident parameters (hoisted casts, packed lane width) -----------
    w32 = weight.astype(jnp.float32).reshape(H)
    if bias is None:
        b32 = jnp.zeros((H,), jnp.float32)
    else:
        b32 = bias.astype(jnp.float32).reshape(H)
    wp = jnp.tile(w32, k).reshape(1, W)
    bp = jnp.tile(b32, k).reshape(1, W)

    inputs = [xp, wp, bp]
    in_specs = [
        pl.BlockSpec((tm, W), lambda i: (i, 0)),
        pl.BlockSpec((1, W), lambda i: (0, 0)),
        pl.BlockSpec((1, W), lambda i: (0, 0)),
    ]
    if k > 1:
        # Block-diagonal segment-sum matrix, built once in the wrapper and
        # resident via a constant index_map (one 64 KiB DMA, then reused).
        r = jnp.arange(W, dtype=jnp.int32) // H
        seg = (r[:, None] == r[None, :]).astype(jnp.float32)
        inputs.append(seg)
        in_specs.append(pl.BlockSpec((W, W), lambda i: (0, 0)))

    # Request what this kernel actually needs plus headroom (no artificial
    # floor/ceiling); by construction this stays well under 48 MiB.
    vmem_limit = int(
        tm * (io_bytes_per_row + tmp_bytes_per_row)   # tiles + f32 temps
        + 2 * (W * W * 4 + 2 * W * 4)                 # resident seg/weight/bias
        + (4 << 20)                                   # compiler scratch headroom
    )
    vmem_limit = min(vmem_limit, 48 * 1024 * 1024)

    flops = 10 * rp * W + (4 * rp * W * W if k > 1 else 0)   # incl. stat matmuls
    cost = pl.CostEstimate(
        flops=int(flops),
        transcendentals=int(rp * W),                  # rsqrt on the broadcast var
        bytes_accessed=int(2 * rp * W * eb + (W * W * 4 if k > 1 else 0) + 2 * W * 4),
    )

    out = pl.pallas_call(
        _make_layer_norm_kernel(float(eps), k, H, tm, chunk),
        out_shape=jax.ShapeDtypeStruct((rp, W), x.dtype),
        grid_spec=pltpu.PrefetchScalarGridSpec(
            num_scalar_prefetch=0,
            grid=(grid,),
            in_specs=in_specs,
            out_specs=pl.BlockSpec((tm, W), lambda i: (i, 0)),
        ),
        compiler_params=pltpu.CompilerParams(
            dimension_semantics=("parallel",),
            vmem_limit_bytes=vmem_limit,
        ),
        cost_estimate=cost,
    )(*inputs)

    out = out.reshape(rows_pad, H)
    if rows_pad != rows:
        out = out[:rows]
    return out.reshape(orig_shape)


def _ref_layer_norm(x, w, b, eps):
    xf = x.astype(jnp.float32)
    mean = jnp.mean(xf, axis=-1, keepdims=True)
    var = jnp.mean((xf - mean) ** 2, axis=-1, keepdims=True)
    return ((xf - mean) * jax.lax.rsqrt(var + eps) * w + b).astype(x.dtype)


if __name__ == "__main__":
    # Module config: normalized_shape = partitioned_dim = hidden = 32.
    batch, seq, hidden = 2, 8, 32
    eps = 1e-5

    key = jax.random.PRNGKey(0)
    x = jax.random.normal(key, (batch, seq, hidden), dtype=jnp.float32)

    # Deterministic params mirroring the module init: weight=ones, bias=zeros.
    weight = jnp.ones((hidden,), dtype=jnp.float32)
    bias = jnp.zeros((hidden,), dtype=jnp.float32)

    y = layer_norm(x, weight, bias, eps=eps)
    jax.block_until_ready(y)
    assert y.shape == x.shape
    assert jnp.allclose(y, _ref_layer_norm(x, weight, bias, eps),
                        atol=1e-5, rtol=1e-5), "mismatch vs reference (H=32)"

    # H >= 128 path (k == 1) with a ragged row count (single full-array block).
    x2 = jax.random.normal(jax.random.PRNGKey(1), (3, 5, 128), dtype=jnp.float32)
    w2 = jax.random.normal(jax.random.PRNGKey(2), (128,), dtype=jnp.float32)
    b2 = jax.random.normal(jax.random.PRNGKey(3), (128,), dtype=jnp.float32)
    y2 = layer_norm(x2, w2, b2, eps=eps)
    jax.block_until_ready(y2)
    assert jnp.allclose(y2, _ref_layer_norm(x2, w2, b2, eps),
                        atol=1e-4, rtol=1e-4), "mismatch vs reference (H=128)"

    # Packed path with rows not a multiple of k (pads <= k-1 rows only).
    x3 = jax.random.normal(jax.random.PRNGKey(4), (3, 32), dtype=jnp.float32)
    y3 = layer_norm(x3, weight, bias, eps=eps)
    jax.block_until_ready(y3)
    assert jnp.allclose(y3, _ref_layer_norm(x3, weight, bias, eps),
                        atol=1e-5, rtol=1e-5), "mismatch vs reference (rows % k != 0)"

    # Multi-block grid + ragged last block + in-kernel chunked compute path.
    x4 = jax.random.normal(jax.random.PRNGKey(5), (4099, 256), dtype=jnp.float32)
    w4 = jax.random.normal(jax.random.PRNGKey(6), (256,), dtype=jnp.float32)
    b4 = jax.random.normal(jax.random.PRNGKey(7), (256,), dtype=jnp.float32)
    y4 = layer_norm(x4, w4, b4, eps=eps)
    jax.block_until_ready(y4)
    assert jnp.allclose(y4, _ref_layer_norm(x4, w4, b4, eps),
                        atol=1e-4, rtol=1e-4), "mismatch vs reference (multi-block)"

    print("KERNEL_OK")
</pallas_src>

<mosaic_0001>
module attributes {stable_mosaic.version = 11 : i64} {
  func.func @kernel(%arg0: i32, %arg1: memref<4x128xf32, #tpu.memory_space<vmem>>, %arg2: memref<1x128xf32, #tpu.memory_space<vmem>>, %arg3: memref<1x128xf32, #tpu.memory_space<vmem>>, %arg4: memref<128x128xf32, #tpu.memory_space<vmem>>, %arg5: memref<4x128xf32, #tpu.memory_space<vmem>>) attributes {dimension_semantics = [#tpu.dimension_semantics<parallel>], iteration_bounds = array<i64: 1>, scalar_prefetch = 0 : i64, scratch_operands = 0 : i64, tpu.core_type = #tpu.core_type<tc>, window_params = [{transform_indices = @transform_0, window_bounds = array<i64: 4, 128>}, {pipeline_mode = #tpu.pipeline_mode<synchronous>, transform_indices = @transform_1, window_bounds = array<i64: 1, 128>}, {pipeline_mode = #tpu.pipeline_mode<synchronous>, transform_indices = @transform_2, window_bounds = array<i64: 1, 128>}, {pipeline_mode = #tpu.pipeline_mode<synchronous>, transform_indices = @transform_3, window_bounds = array<i64: 128, 128>}, {transform_indices = @transform_4, window_bounds = array<i64: 4, 128>}]} {
    %c0 = arith.constant 0 : index
    %c0_0 = arith.constant 0 : index
    %0 = vector.load %arg2[%c0, %c0_0] : memref<1x128xf32, #tpu.memory_space<vmem>>, vector<1x128xf32>
    %c0_1 = arith.constant 0 : index
    %c0_2 = arith.constant 0 : index
    %1 = vector.load %arg3[%c0_1, %c0_2] : memref<1x128xf32, #tpu.memory_space<vmem>>, vector<1x128xf32>
    %c0_3 = arith.constant 0 : index
    %c0_4 = arith.constant 0 : index
    %2 = vector.load %arg4[%c0_3, %c0_4] : memref<128x128xf32, #tpu.memory_space<vmem>>, vector<128x128xf32>
    %c0_5 = arith.constant 0 : index
    %c0_6 = arith.constant 0 : index
    %3 = vector.load %arg1[%c0_5, %c0_6] : memref<4x128xf32, #tpu.memory_space<vmem>>, vector<4x128xf32>
    %cst = arith.constant dense<0.000000e+00> : vector<4x128xf32>
    %4 = tpu.matmul %3, %2, %cst {dimension_numbers = #tpu.dot_dimension_numbers<[1], [0], [0], [1], [0, 0, 1, 1], [], []>} : vector<4x128xf32>, vector<128x128xf32>, vector<4x128xf32> -> vector<4x128xf32>
    %cst_7 = arith.constant 3.125000e-02 : f32
    %5 = vector.broadcast %cst_7 : f32 to vector<4x128xf32>
    %6 = arith.mulf %4, %5 : vector<4x128xf32>
    %7 = arith.subf %3, %6 : vector<4x128xf32>
    %8 = arith.mulf %7, %7 : vector<4x128xf32>
    %cst_8 = arith.constant dense<0.000000e+00> : vector<4x128xf32>
    %9 = tpu.matmul %8, %2, %cst_8 {dimension_numbers = #tpu.dot_dimension_numbers<[1], [0], [0], [1], [0, 0, 1, 1], [], []>} : vector<4x128xf32>, vector<128x128xf32>, vector<4x128xf32> -> vector<4x128xf32>
    %cst_9 = arith.constant 3.125000e-02 : f32
    %10 = vector.broadcast %cst_9 : f32 to vector<4x128xf32>
    %11 = arith.mulf %9, %10 : vector<4x128xf32>
    %cst_10 = arith.constant 9.99999974E-6 : f32
    %12 = vector.broadcast %cst_10 : f32 to vector<4x128xf32>
    %13 = arith.addf %11, %12 : vector<4x128xf32>
    %14 = math.rsqrt %13 : vector<4x128xf32>
    %15 = arith.mulf %7, %14 : vector<4x128xf32>
    %16 = vector.broadcast %0 : vector<1x128xf32> to vector<4x128xf32>
    %17 = arith.mulf %15, %16 : vector<4x128xf32>
    %18 = vector.broadcast %1 : vector<1x128xf32> to vector<4x128xf32>
    %19 = arith.addf %17, %18 : vector<4x128xf32>
    %c0_11 = arith.constant 0 : index
    %c0_12 = arith.constant 0 : index
    %20 = vector.load %arg5[%c0_11, %c0_12] : memref<4x128xf32, #tpu.memory_space<vmem>>, vector<4x128xf32>
    tpu.vector_store %arg5[%c0_11, %c0_12], %19 {strides = array<i32>} : memref<4x128xf32, #tpu.memory_space<vmem>>, vector<4x128xf32>,
    return
  }
  func.func @transform_0(%arg0: i32) -> (i32, i32) {
    %c0_i32 = arith.constant 0 : i32
    %c0_i32_0 = arith.constant 0 : i32
    return %arg0, %c0_i32 : i32, i32
  }
  func.func @transform_1(%arg0: i32) -> (i32, i32) {
    %c0_i32 = arith.constant 0 : i32
    %c0_i32_0 = arith.constant 0 : i32
    %c0_i32_1 = arith.constant 0 : i32
    return %c0_i32, %c0_i32_0 : i32, i32
  }
  func.func @transform_2(%arg0: i32) -> (i32, i32) {
    %c0_i32 = arith.constant 0 : i32
    %c0_i32_0 = arith.constant 0 : i32
    %c0_i32_1 = arith.constant 0 : i32
    return %c0_i32, %c0_i32_0 : i32, i32
  }
  func.func @transform_3(%arg0: i32) -> (i32, i32) {
    %c0_i32 = arith.constant 0 : i32
    %c0_i32_0 = arith.constant 0 : i32
    %c0_i32_1 = arith.constant 0 : i32
    return %c0_i32, %c0_i32_0 : i32, i32
  }
  func.func @transform_4(%arg0: i32) -> (i32, i32) {
    %c0_i32 = arith.constant 0 : i32
    %c0_i32_0 = arith.constant 0 : i32
    return %arg0, %c0_i32 : i32, i32
  }
}

</mosaic_0001>

<llo_original>
// kernel: tpu_custom_call.1
$region0: #{tpu_custom_call.1}
  #allocation0 [shape = 'u32[]', space=smem, size = 0x4, offset = 0x4, fixed_abs, tag = 'smem constant byte address 0x4 - core index']
  #allocation1 [shape = 'u32[144,128]{1,0:T(1,128)}', space=vmem, size = 0x12000, scoped, tag = 'internal scratch']
  %s0 = inlined_call_operand.hbm [shape: f32[4,128], index: 0, kind: input, shape index: {}]
  %s1 = inlined_call_operand.vmem [shape: f32[1,128], index: 1, kind: input, shape index: {}]
  %s2 = inlined_call_operand.vmem [shape: f32[1,128], index: 2, kind: input, shape index: {}]
  %s3 = inlined_call_operand.hbm [shape: f32[128,128], index: 3, kind: input, shape index: {}]
  %s4 = inlined_call_operand.hbm [shape: f32[4,128], index: 4, kind: output, shape index: {}]
  %s5 = sld [smem:[#allocation0]]
  $region34: #{tpu_custom_call.1} parent=0
    _
  %s7 = ssub.s32 1, %s5
  %s8 = scalar_select 0, %s7, %s5
  $region1: #{tpu_custom_call.1} parent=0
    #allocation2 [shape = 'u8[2048]{0}', space=vmem, size = 0x800, scoped, tag = 'input window, operand 0, single buffered']
    #allocation3 [shape = 's32[1]{0}', space=sflag, size = 0x4, scoped, tag = 'scoped memory for tpu_custom_call.1']
    #allocation4 [shape = 's32[1]{0}', space=sflag, size = 0x4, scoped, tag = 'scoped memory for tpu_custom_call.1']
    #allocation5 [shape = 'u8[65536]{0}', space=vmem, size = 0x10000, scoped, tag = 'input window, operand 3, single buffered']
    #allocation6 [shape = 's32[1]{0}', space=sflag, size = 0x4, scoped, tag = 'scoped memory for tpu_custom_call.1']
    #allocation7 [shape = 'u8[2048]{0}', space=vmem, size = 0x800, scoped, tag = 'output window, operand 0, single buffered']
    %9 = vsyncpa [#allocation3], 0
    %10 = vsyncpa [#allocation6], 0
    %11 = vsyncpa [#allocation4], 0
    // Predicated region
    $region2: #{tpu_custom_call.1} parent=1 // pred_check
      _
    $region3: #{tpu_custom_call.1} parent=1 // pred_check_branch
      %13 = sbr.rel (0) target = $region5
    $region4: #{tpu_custom_call.1} parent=1 // pred_region
      %s15 = ssub.s32 64, 64
      %16 = vsyncadd [#allocation3], %s15
      %s18 = sshll.u32 [#allocation2], 4
      %s19 = int_to_ptr.vmem [resolvable:$true] %s18
      %21 = dma.hbm_to_vmem [thread:$0]  %s0, 64, %s19, [#allocation3]
    $region5: #{tpu_custom_call.1} parent=1 // pred_fallthru
      _
    // Predicated region
    $region6: #{tpu_custom_call.1} parent=1 // pred_check
      _
    $region7: #{tpu_custom_call.1} parent=1 // pred_check_branch
      %23 = sbr.rel (0) target = $region9
    $region8: #{tpu_custom_call.1} parent=1 // pred_region
      _
    $region9: #{tpu_custom_call.1} parent=1 // pred_fallthru
      _
    // Predicated region
    $region10: #{tpu_custom_call.1} parent=1 // pred_check
      _
    $region11: #{tpu_custom_call.1} parent=1 // pred_check_branch
      %25 = sbr.rel (0) target = $region13
    $region12: #{tpu_custom_call.1} parent=1 // pred_region
      _
    $region13: #{tpu_custom_call.1} parent=1 // pred_fallthru
      _
    // Predicated region
    $region14: #{tpu_custom_call.1} parent=1 // pred_check
      _
    $region15: #{tpu_custom_call.1} parent=1 // pred_check_branch
      %27 = sbr.rel (0) target = $region17
    $region16: #{tpu_custom_call.1} parent=1 // pred_region
      %s29 = ssub.s32 2048, 2048
      %30 = vsyncadd [#allocation6], %s29
      %s31 = sshll.u32 [#allocation5], 4
      %s32 = int_to_ptr.vmem [resolvable:$true] %s31
      %37 = dma.hbm_to_vmem [thread:$0]  %s3, 2048, %s32, [#allocation6], 128, 128, 8
    $region17: #{tpu_custom_call.1} parent=1 // pred_fallthru
      _
    // Predicated region
    $region18: #{tpu_custom_call.1} parent=1 // pred_check
      _
    $region19: #{tpu_custom_call.1} parent=1 // pred_check_branch
      %39 = sbr.rel (0) target = $region21
    $region20: #{tpu_custom_call.1} parent=1 // pred_region
      %40 = dma.done [#allocation3], 64
    $region21: #{tpu_custom_call.1} parent=1 // pred_fallthru
      _
    // Predicated region
    $region22: #{tpu_custom_call.1} parent=1 // pred_check
      _
    $region23: #{tpu_custom_call.1} parent=1 // pred_check_branch
      %42 = sbr.rel (0) target = $region25
    $region24: #{tpu_custom_call.1} parent=1 // pred_region
      %43 = dma.done [#allocation6], 2048
    $region25: #{tpu_custom_call.1} parent=1 // pred_fallthru
      _
    %v44 = vld [vmem:[%s1] sm:$0x1]
    %v45 = vld [vmem:[%s2] sm:$0x1]
    %v46 = vld [vmem:[#allocation5] sm:$0xff]
    %v47 = vld [vmem:[#allocation5 + $0x8] sm:$0xff]
    %v48 = vld [vmem:[#allocation5 + $0x10] sm:$0xff]
    %v49 = vld [vmem:[#allocation5 + $0x18] sm:$0xff]
    %v50 = vld [vmem:[#allocation5 + $0x20] sm:$0xff]
    %v51 = vld [vmem:[#allocation5 + $0x28] sm:$0xff]
    %v52 = vld [vmem:[#allocation5 + $0x30] sm:$0xff]
    %v53 = vld [vmem:[#allocation5 + $0x38] sm:$0xff]
    %v54 = vld [vmem:[#allocation5 + $0x40] sm:$0xff]
    %v55 = vld [vmem:[#allocation5 + $0x48] sm:$0xff]
    %v56 = vld [vmem:[#allocation5 + $0x50] sm:$0xff]
    %v57 = vld [vmem:[#allocation5 + $0x58] sm:$0xff]
    %v58 = vld [vmem:[#allocation5 + $0x60] sm:$0xff]
    %v59 = vld [vmem:[#allocation5 + $0x68] sm:$0xff]
    %v60 = vld [vmem:[#allocation5 + $0x70] sm:$0xff]
    %v61 = vld [vmem:[#allocation5 + $0x78] sm:$0xff]
    %v62 = vld [vmem:[#allocation2] sm:$0xf]
    %63 = vmatprep.subr.mxu0 0.0
    %64 = vmatpush1.msra.mxu0 %v46
    %65 = vmatprep.subr.mxu0 0.0
    %66 = vmatpush1.msra.mxu0 %v47
    %67 = vmatprep.subr.mxu0 0.0
    %68 = vmatpush1.msra.mxu0 %v48
    %69 = vmatprep.subr.mxu0 0.0
    %70 = vmatpush1.msra.mxu0 %v49
    %71 = vmatprep.subr.mxu0 0.0
    %72 = vmatpush1.msra.mxu0 %v50
    %73 = vmatprep.subr.mxu0 0.0
    %74 = vmatpush1.msra.mxu0 %v51
    %75 = vmatprep.subr.mxu0 0.0
    %76 = vmatpush1.msra.mxu0 %v52
    %77 = vmatprep.subr.mxu0 0.0
    %78 = vmatpush1.msra.mxu0 %v53
    %79 = vmatprep.subr.mxu0 0.0
    %80 = vmatpush1.msra.mxu0 %v54
    %81 = vmatprep.subr.mxu0 0.0
    %82 = vmatpush1.msra.mxu0 %v55
    %83 = vmatprep.subr.mxu0 0.0
    %84 = vmatpush1.msra.mxu0 %v56
    %85 = vmatprep.subr.mxu0 0.0
    %86 = vmatpush1.msra.mxu0 %v57
    %87 = vmatprep.subr.mxu0 0.0
    %88 = vmatpush1.msra.mxu0 %v58
    %89 = vmatprep.subr.mxu0 0.0
    %90 = vmatpush1.msra.mxu0 %v59
    %91 = vmatprep.subr.mxu0 0.0
    %92 = vmatpush1.msra.mxu0 %v60
    %93 = vmatprep.subr.mxu0 0.0
    %94 = vmatpush1.msra.mxu0 %v61
    %95 = vmatprep.subr.mxu0 0.0
    %96 = vmatpush1.msra.mxu0 0.0
    %97 = vmatprep.subr.mxu0 0.0
    %98 = vmatpush1.msra.mxu0 0.0
    %99 = vmatprep.subr.mxu0 0.0
    %100 = vmatpush1.msra.mxu0 0.0
    %101 = vmatprep.subr.mxu0 0.0
    %102 = vmatpush1.msra.mxu0 0.0
    %103 = vmatprep.subr.mxu0 0.0
    %104 = vmatpush1.msra.mxu0 0.0
    %105 = vmatprep.subr.mxu0 0.0
    %106 = vmatpush1.msra.mxu0 0.0
    %107 = vmatprep.subr.mxu0 0.0
    %108 = vmatpush1.msra.mxu0 0.0
    %109 = vmatprep.subr.mxu0 0.0
    %110 = vmatpush1.msra.mxu0 0.0
    %111 = vmatprep.subr.mxu0 0.0
    %112 = vmatpush1.msra.mxu0 0.0
    %113 = vmatprep.subr.mxu0 0.0
    %114 = vmatpush1.msra.mxu0 0.0
    %115 = vmatprep.subr.mxu0 0.0
    %116 = vmatpush1.msra.mxu0 0.0
    %117 = vmatprep.subr.mxu0 0.0
    %118 = vmatpush1.msra.mxu0 0.0
    %119 = vmatprep.subr.mxu0 0.0
    %120 = vmatpush1.msra.mxu0 0.0
    %121 = vmatprep.subr.mxu0 0.0
    %122 = vmatpush1.msra.mxu0 0.0
    %123 = vmatprep.subr.mxu0 0.0
    %124 = vmatpush1.msra.mxu0 0.0
    %125 = vmatprep.subr.mxu0 0.0
    %126 = vmatpush1.msra.mxu0 0.0
    %127 = vmatprep.mubr.f32.mxu0 0.0
    %128 = vmatmul.mubr.f32.gmra.mrb[0].mxu0 %v62
    %v129 = vpop.f32.mrb[0].mxu0
    %v130 = vadd.f32 0.0, %v129
    %v131 = vpop.f32.mrb[0].mxu0
    %132 = vdwg.mxu0
    %v133 = vmul.f32 %v130, 0.03125
    %v134 = vsub.f32 %v62, %v133
    %v135 = vmul.f32 %v134, %v134
    %136 = vmatprep.subr.mxu0 0.0
    %137 = vmatpush1.msra.mxu0 %v46
    %138 = vmatprep.subr.mxu0 0.0
    %139 = vmatpush1.msra.mxu0 %v47
    %140 = vmatprep.subr.mxu0 0.0
    %141 = vmatpush1.msra.mxu0 %v48
    %142 = vmatprep.subr.mxu0 0.0
    %143 = vmatpush1.msra.mxu0 %v49
    %144 = vmatprep.subr.mxu0 0.0
    %145 = vmatpush1.msra.mxu0 %v50
    %146 = vmatprep.subr.mxu0 0.0
    %147 = vmatpush1.msra.mxu0 %v51
    %148 = vmatprep.subr.mxu0 0.0
    %149 = vmatpush1.msra.mxu0 %v52
    %150 = vmatprep.subr.mxu0 0.0
    %151 = vmatpush1.msra.mxu0 %v53
    %152 = vmatprep.subr.mxu0 0.0
    %153 = vmatpush1.msra.mxu0 %v54
    %154 = vmatprep.subr.mxu0 0.0
    %155 = vmatpush1.msra.mxu0 %v55
    %156 = vmatprep.subr.mxu0 0.0
    %157 = vmatpush1.msra.mxu0 %v56
    %158 = vmatprep.subr.mxu0 0.0
    %159 = vmatpush1.msra.mxu0 %v57
    %160 = vmatprep.subr.mxu0 0.0
    %161 = vmatpush1.msra.mxu0 %v58
    %162 = vmatprep.subr.mxu0 0.0
    %163 = vmatpush1.msra.mxu0 %v59
    %164 = vmatprep.subr.mxu0 0.0
    %165 = vmatpush1.msra.mxu0 %v60
    %166 = vmatprep.subr.mxu0 0.0
    %167 = vmatpush1.msra.mxu0 %v61
    %168 = vmatprep.subr.mxu0 0.0
    %169 = vmatpush1.msra.mxu0 0.0
    %170 = vmatprep.subr.mxu0 0.0
    %171 = vmatpush1.msra.mxu0 0.0
    %172 = vmatprep.subr.mxu0 0.0
    %173 = vmatpush1.msra.mxu0 0.0
    %174 = vmatprep.subr.mxu0 0.0
    %175 = vmatpush1.msra.mxu0 0.0
    %176 = vmatprep.subr.mxu0 0.0
    %177 = vmatpush1.msra.mxu0 0.0
    %178 = vmatprep.subr.mxu0 0.0
    %179 = vmatpush1.msra.mxu0 0.0
    %180 = vmatprep.subr.mxu0 0.0
    %181 = vmatpush1.msra.mxu0 0.0
    %182 = vmatprep.subr.mxu0 0.0
    %183 = vmatpush1.msra.mxu0 0.0
    %184 = vmatprep.subr.mxu0 0.0
    %185 = vmatpush1.msra.mxu0 0.0
    %186 = vmatprep.subr.mxu0 0.0
    %187 = vmatpush1.msra.mxu0 0.0
    %188 = vmatprep.subr.mxu0 0.0
    %189 = vmatpush1.msra.mxu0 0.0
    %190 = vmatprep.subr.mxu0 0.0
    %191 = vmatpush1.msra.mxu0 0.0
    %192 = vmatprep.subr.mxu0 0.0
    %193 = vmatpush1.msra.mxu0 0.0
    %194 = vmatprep.subr.mxu0 0.0
    %195 = vmatpush1.msra.mxu0 0.0
    %196 = vmatprep.subr.mxu0 0.0
    %197 = vmatpush1.msra.mxu0 0.0
    %198 = vmatprep.subr.mxu0 0.0
    %199 = vmatpush1.msra.mxu0 0.0
    %200 = vmatprep.mubr.f32.mxu0 0.0
    %201 = vmatmul.mubr.f32.gmra.mrb[0].mxu0 %v135
    %v202 = vpop.f32.mrb[0].mxu0
    %v203 = vadd.f32 0.0, %v202
    %v204 = vpop.f32.mrb[0].mxu0
    %205 = vdwg.mxu0
    %v206 = vmul.f32 %v203, 0.03125
    %v207 = vadd.f32 %v206, 1e-05
    %v208 = vrsqrt.pop %v207
    %v209 = vmul.f32 %v134, %v208
    %v211 = vlaneseq
    %v212 = vshrl.u32 %v211, 7
    %v213 = vsub.s32 0, %v212
    %v214 = vrot.slane %v44, %v213
    %v216 = vmul.f32 %v209, %v214
    %v218 = vlaneseq
    %v219 = vshrl.u32 %v218, 7
    %v220 = vsub.s32 0, %v219
    %v221 = vrot.slane %v45, %v220
    %v223 = vadd.f32 %v216, %v221
    %224 = vst [vmem:[#allocation7] sm:$0xf] %v223
    // Predicated region
    $region26: #{tpu_custom_call.1} parent=1 // pred_check
      _
    $region27: #{tpu_custom_call.1} parent=1 // pred_check_branch
      %226 = sbr.rel (0) target = $region29
    $region28: #{tpu_custom_call.1} parent=1 // pred_region
      %s228 = ssub.s32 64, 64
      %229 = vsyncadd [#allocation4], %s228
      %s231 = sshll.u32 [#allocation7], 4
      %s232 = int_to_ptr.vmem [resolvable:$true] %s231
      %234 = dma.vmem_to_hbm [thread:$0]  %s232, 64, %s4, [#allocation4]
    $region29: #{tpu_custom_call.1} parent=1 // pred_fallthru
      _
    // Predicated region
    $region30: #{tpu_custom_call.1} parent=1 // pred_check
      _
    $region31: #{tpu_custom_call.1} parent=1 // pred_check_branch
      %236 = sbr.rel (0) target = $region33
    $region32: #{tpu_custom_call.1} parent=1 // pred_region
      %237 = dma.done [#allocation4], 64
    $region33: #{tpu_custom_call.1} parent=1 // pred_fallthru
      _
    %238 = vsyncpa [#allocation3], 1
    %239 = vsyncpa [#allocation6], 1
    %240 = vsyncpa [#allocation4], 1

</llo_original>
